<compile_context>
chip_gen: v6e
topology: v6e:2x2x1
jax: 0.10.0
libtpu: 0.0.40
codegen_flags: <defaults>
</compile_context>

<pallas_src>
import functools

import jax
import jax.numpy as jnp
from jax import lax
from jax.experimental import pallas as pl
from jax.experimental.pallas import tpu as pltpu


def _fpn_kernel(t, n, *refs):
    # refs = (x_0 ... x_{t-1}, w, b, out)
    #   x_i: [B, E]   w: [E, N]   b: [1, N]   out: [B, 2N+2]
    x_refs = refs[:t]
    w_ref = refs[t]
    b_ref = refs[t + 1]
    out_ref = refs[t + 2]

    # --- time-mean BEFORE the Linear (exact by linearity) -------------- VPU
    x_sum = x_refs[0][...]
    for r in x_refs[1:]:                       # T small, unrolled at trace time
        x_sum = x_sum + r[...]
    x_mean = x_sum * (1.0 / t)                                        # [B, E]

    # --- Linear(embedding_dim -> num_fractions) on the mean ------------ MXU
    logits = (
        jnp.dot(x_mean, w_ref[...], preferred_element_type=jnp.float32)
        + b_ref[...]
    )                                                                 # [B, N]

    # --- Categorical(logits): numerically stable softmax ---------- VPU/EUP
    mmax = jnp.max(logits, axis=-1, keepdims=True)
    z = logits - mmax
    ez = jnp.exp(z)
    sez = jnp.sum(ez, axis=-1, keepdims=True)
    inv_sez = pl.reciprocal(sez, approx=True)          # EUP slot (nearly free)
    inv_sez = inv_sez * (2.0 - sez * inv_sez)          # 1 Newton step -> exact
    probs = ez * inv_sez                                              # [B, N]

    # --- fused cumsum mask: cols [0..N]    -> taus      (padded cumsum)
    #                        cols [N+1..2N] -> tau_hats  (cumsum_<j + p_j/2)
    r_i = lax.broadcasted_iota(jnp.int32, (n, 2 * n + 1), 0)
    c_i = lax.broadcasted_iota(jnp.int32, (n, 2 * n + 1), 1)
    c_hat = c_i - (n + 1)
    m_tau = (r_i < c_i).astype(jnp.float32)
    m_hat = jnp.where(r_i < c_hat, 1.0, jnp.where(r_i == c_hat, 0.5, 0.0))
    m_fused = jnp.where(c_i <= n, m_tau, m_hat)                       # [N, 2N+1]

    taus_and_hats = jnp.dot(
        probs, m_fused, preferred_element_type=jnp.float32
    )                                                                 # [B, 2N+1]

    # --- entropy = -sum p*logp = log(sez) - sum(p*z) -------------------- VPU
    ent = jnp.log(sez) - jnp.sum(probs * z, axis=-1, keepdims=True)   # [B, 1]

    # --- one lane-contiguous output buffer ------------------------------
    out_ref[:, : 2 * n + 1] = taus_and_hats
    out_ref[:, 2 * n + 1 :] = ent


def spike_fraction_proposal_forward(state_embeddings_list, weight, bias):
    """Forward of SpikeFractionProposalNetwork.

    state_embeddings_list: list of T arrays, each [B, E] (float32).
    weight: [N, E] (PyTorch nn.Linear layout), bias: [N].
    Returns (taus [B, N+1], tau_hats [B, N], entropies [B]).
    """
    t = len(state_embeddings_list)
    xs = [jnp.asarray(x, jnp.float32) for x in state_embeddings_list]
    b_sz, _ = xs[0].shape
    n = weight.shape[0]
    w = jnp.asarray(weight, jnp.float32).T                            # [E, N]
    bias2d = jnp.asarray(bias, jnp.float32).reshape(1, n)             # [1, N]

    out = pl.pallas_call(
        functools.partial(_fpn_kernel, t, n),
        out_shape=jax.ShapeDtypeStruct((b_sz, 2 * n + 2), jnp.float32),
        in_specs=[
            pl.BlockSpec(memory_space=pltpu.MemorySpace.VMEM)
            for _ in range(t + 2)
        ],
        out_specs=pl.BlockSpec(memory_space=pltpu.MemorySpace.VMEM),
    )(*xs, w, bias2d)

    taus = out[:, : n + 1]
    tau_hats = out[:, n + 1 : 2 * n + 1]
    entropies = out[:, 2 * n + 1]
    return taus, tau_hats, entropies


def _reference(state_embeddings_list, weight, bias):
    # Pure-JAX mirror of the PyTorch module, for a tolerance check.
    x = jnp.stack(state_embeddings_list).astype(jnp.float32)          # [T, B, E]
    logits = jnp.einsum("tbe,ne->tbn", x, weight) + bias              # [T, B, N]
    lm = logits.mean(0)                                               # [B, N]
    p = jax.nn.softmax(lm, axis=-1)
    logp = jax.nn.log_softmax(lm, axis=-1)
    taus = jnp.pad(jnp.cumsum(p, axis=1), ((0, 0), (1, 0)))
    tau_hats = (taus[:, :-1] + taus[:, 1:]) / 2.0
    ent = -jnp.sum(p * logp, axis=-1)
    return taus, tau_hats, ent


if __name__ == "__main__":
    # Small shapes consistent with the module's forward:
    #   T (time_window)=8, B (batch)=2, E (embedding_dim)=32, N (num_fractions)=8
    T, B, E, N = 8, 2, 32, 8
    key = jax.random.PRNGKey(0)
    k_w, k_x = jax.random.split(key)

    # Deterministic param init mirroring __init__:
    #   xavier_uniform_(weight, gain=0.01) on shape [N, E]; bias = 0
    bound = 0.01 * (6.0 / (E + N)) ** 0.5
    weight = jax.random.uniform(k_w, (N, E), jnp.float32, -bound, bound)
    bias = jnp.zeros((N,), jnp.float32)

    # The module receives a *list* of per-timestep embeddings, each [B, E].
    state_embeddings = [
        jax.random.normal(jax.random.fold_in(k_x, t), (B, E), jnp.float32)
        for t in range(T)
    ]

    taus, tau_hats, entropies = spike_fraction_proposal_forward(
        state_embeddings, weight, bias)
    jax.block_until_ready((taus, tau_hats, entropies))

    assert taus.shape == (B, N + 1)
    assert tau_hats.shape == (B, N)
    assert entropies.shape == (B,)

    r_taus, r_hats, r_ent = _reference(state_embeddings, weight, bias)
    assert bool(jnp.allclose(taus, r_taus, rtol=1e-4, atol=1e-4))
    assert bool(jnp.allclose(tau_hats, r_hats, rtol=1e-4, atol=1e-4))
    assert bool(jnp.allclose(entropies, r_ent, rtol=1e-4, atol=1e-4))

    print("KERNEL_OK")
</pallas_src>

<mosaic_0001>
module attributes {stable_mosaic.version = 11 : i64} {
  func.func @_fpn_kernel(%arg0: memref<2x32xf32, #tpu.memory_space<vmem>>, %arg1: memref<2x32xf32, #tpu.memory_space<vmem>>, %arg2: memref<2x32xf32, #tpu.memory_space<vmem>>, %arg3: memref<2x32xf32, #tpu.memory_space<vmem>>, %arg4: memref<2x32xf32, #tpu.memory_space<vmem>>, %arg5: memref<2x32xf32, #tpu.memory_space<vmem>>, %arg6: memref<2x32xf32, #tpu.memory_space<vmem>>, %arg7: memref<2x32xf32, #tpu.memory_space<vmem>>, %arg8: memref<32x8xf32, #tpu.memory_space<vmem>>, %arg9: memref<1x8xf32, #tpu.memory_space<vmem>>, %arg10: memref<2x18xf32, #tpu.memory_space<vmem>>) attributes {dimension_semantics = [], scalar_prefetch = 0 : i64, scratch_operands = 0 : i64, tpu.core_type = #tpu.core_type<tc>} {
    %c0 = arith.constant 0 : index
    %c0_0 = arith.constant 0 : index
    %0 = vector.load %arg0[%c0, %c0_0] : memref<2x32xf32, #tpu.memory_space<vmem>>, vector<2x32xf32>
    %c0_1 = arith.constant 0 : index
    %c0_2 = arith.constant 0 : index
    %1 = vector.load %arg1[%c0_1, %c0_2] : memref<2x32xf32, #tpu.memory_space<vmem>>, vector<2x32xf32>
    %2 = arith.addf %0, %1 : vector<2x32xf32>
    %c0_3 = arith.constant 0 : index
    %c0_4 = arith.constant 0 : index
    %3 = vector.load %arg2[%c0_3, %c0_4] : memref<2x32xf32, #tpu.memory_space<vmem>>, vector<2x32xf32>
    %4 = arith.addf %2, %3 : vector<2x32xf32>
    %c0_5 = arith.constant 0 : index
    %c0_6 = arith.constant 0 : index
    %5 = vector.load %arg3[%c0_5, %c0_6] : memref<2x32xf32, #tpu.memory_space<vmem>>, vector<2x32xf32>
    %6 = arith.addf %4, %5 : vector<2x32xf32>
    %c0_7 = arith.constant 0 : index
    %c0_8 = arith.constant 0 : index
    %7 = vector.load %arg4[%c0_7, %c0_8] : memref<2x32xf32, #tpu.memory_space<vmem>>, vector<2x32xf32>
    %8 = arith.addf %6, %7 : vector<2x32xf32>
    %c0_9 = arith.constant 0 : index
    %c0_10 = arith.constant 0 : index
    %9 = vector.load %arg5[%c0_9, %c0_10] : memref<2x32xf32, #tpu.memory_space<vmem>>, vector<2x32xf32>
    %10 = arith.addf %8, %9 : vector<2x32xf32>
    %c0_11 = arith.constant 0 : index
    %c0_12 = arith.constant 0 : index
    %11 = vector.load %arg6[%c0_11, %c0_12] : memref<2x32xf32, #tpu.memory_space<vmem>>, vector<2x32xf32>
    %12 = arith.addf %10, %11 : vector<2x32xf32>
    %c0_13 = arith.constant 0 : index
    %c0_14 = arith.constant 0 : index
    %13 = vector.load %arg7[%c0_13, %c0_14] : memref<2x32xf32, #tpu.memory_space<vmem>>, vector<2x32xf32>
    %14 = arith.addf %12, %13 : vector<2x32xf32>
    %cst = arith.constant 1.250000e-01 : f32
    %15 = vector.broadcast %cst : f32 to vector<2x32xf32>
    %16 = arith.mulf %14, %15 : vector<2x32xf32>
    %c0_15 = arith.constant 0 : index
    %c0_16 = arith.constant 0 : index
    %17 = vector.load %arg8[%c0_15, %c0_16] : memref<32x8xf32, #tpu.memory_space<vmem>>, vector<32x8xf32>
    %cst_17 = arith.constant dense<0.000000e+00> : vector<2x8xf32>
    %18 = tpu.matmul %16, %17, %cst_17 {dimension_numbers = #tpu.dot_dimension_numbers<[1], [0], [0], [1], [0, 0, 1, 1], [], []>} : vector<2x32xf32>, vector<32x8xf32>, vector<2x8xf32> -> vector<2x8xf32>
    %c0_18 = arith.constant 0 : index
    %c0_19 = arith.constant 0 : index
    %19 = vector.load %arg9[%c0_18, %c0_19] : memref<1x8xf32, #tpu.memory_space<vmem>>, vector<1x8xf32>
    %20 = vector.broadcast %19 : vector<1x8xf32> to vector<2x8xf32>
    %21 = arith.addf %18, %20 : vector<2x8xf32>
    %cst_20 = arith.constant dense<0xFF800000> : vector<2xf32>
    %22 = vector.multi_reduction <maximumf>, %21, %cst_20 [1] : vector<2x8xf32> to vector<2xf32>
    %23 = vector.shape_cast %22 : vector<2xf32> to vector<2x1xf32>
    %24 = vector.broadcast %23 : vector<2x1xf32> to vector<2x8xf32>
    %25 = arith.subf %21, %24 : vector<2x8xf32>
    %26 = math.exp %25 : vector<2x8xf32>
    %cst_21 = arith.constant dense<0.000000e+00> : vector<2xf32>
    %27 = vector.multi_reduction <add>, %26, %cst_21 [1] : vector<2x8xf32> to vector<2xf32>
    %28 = vector.shape_cast %27 : vector<2xf32> to vector<2x1xf32>
    %29 = tpu.reciprocal %28 {approx = true} : vector<2x1xf32> -> vector<2x1xf32>
    %30 = arith.mulf %28, %29 : vector<2x1xf32>
    %cst_22 = arith.constant 2.000000e+00 : f32
    %31 = vector.broadcast %cst_22 : f32 to vector<2x1xf32>
    %32 = arith.subf %31, %30 : vector<2x1xf32>
    %33 = arith.mulf %29, %32 : vector<2x1xf32>
    %34 = vector.broadcast %33 : vector<2x1xf32> to vector<2x8xf32>
    %35 = arith.mulf %26, %34 : vector<2x8xf32>
    %36 = tpu.iota {dimensions = array<i32: 0>} : vector<8x17xi32>
    %37 = tpu.iota {dimensions = array<i32: 1>} : vector<8x17xi32>
    %c9_i32 = arith.constant 9 : i32
    %38 = vector.broadcast %c9_i32 : i32 to vector<8x17xi32>
    %39 = arith.subi %37, %38 : vector<8x17xi32>
    %40 = arith.cmpi slt, %36, %37 : vector<8x17xi32>
    %41 = arith.extui %40 : vector<8x17xi1> to vector<8x17xi32>
    %42 = arith.sitofp %41 : vector<8x17xi32> to vector<8x17xf32>
    %43 = arith.cmpi slt, %36, %39 : vector<8x17xi32>
    %44 = arith.cmpi eq, %36, %39 : vector<8x17xi32>
    %cst_23 = arith.constant 5.000000e-01 : f32
    %cst_24 = arith.constant 0.000000e+00 : f32
    %45 = vector.broadcast %cst_23 : f32 to vector<8x17xf32>
    %46 = vector.broadcast %cst_24 : f32 to vector<8x17xf32>
    %47 = arith.select %44, %45, %46 : vector<8x17xi1>, vector<8x17xf32>
    %cst_25 = arith.constant 1.000000e+00 : f32
    %48 = vector.broadcast %cst_25 : f32 to vector<8x17xf32>
    %49 = arith.select %43, %48, %47 : vector<8x17xi1>, vector<8x17xf32>
    %c8_i32 = arith.constant 8 : i32
    %50 = vector.broadcast %c8_i32 : i32 to vector<8x17xi32>
    %51 = arith.cmpi sle, %37, %50 : vector<8x17xi32>
    %52 = arith.select %51, %42, %49 : vector<8x17xi1>, vector<8x17xf32>
    %cst_26 = arith.constant dense<0.000000e+00> : vector<2x17xf32>
    %53 = tpu.matmul %35, %52, %cst_26 {dimension_numbers = #tpu.dot_dimension_numbers<[1], [0], [0], [1], [0, 0, 1, 1], [], []>} : vector<2x8xf32>, vector<8x17xf32>, vector<2x17xf32> -> vector<2x17xf32>
    %54 = math.log %28 : vector<2x1xf32>
    %55 = arith.mulf %35, %25 : vector<2x8xf32>
    %cst_27 = arith.constant dense<0.000000e+00> : vector<2xf32>
    %56 = vector.multi_reduction <add>, %55, %cst_27 [1] : vector<2x8xf32> to vector<2xf32>
    %57 = vector.shape_cast %56 : vector<2xf32> to vector<2x1xf32>
    %58 = arith.subf %54, %57 : vector<2x1xf32>
    %c0_28 = arith.constant 0 : index
    %c0_29 = arith.constant 0 : index
    %59 = vector.load %arg10[%c0_28, %c0_29] : memref<2x18xf32, #tpu.memory_space<vmem>>, vector<2x17xf32>
    tpu.vector_store %arg10[%c0_28, %c0_29], %53 {strides = array<i32>} : memref<2x18xf32, #tpu.memory_space<vmem>>, vector<2x17xf32>,
    %c0_30 = arith.constant 0 : index
    %c17 = arith.constant 17 : index
    %60 = vector.load %arg10[%c0_30, %c17] : memref<2x18xf32, #tpu.memory_space<vmem>>, vector<2x1xf32>
    tpu.vector_store %arg10[%c0_30, %c17], %58 {strides = array<i32>} : memref<2x18xf32, #tpu.memory_space<vmem>>, vector<2x1xf32>,
    return
  }
}

</mosaic_0001>

<llo_original>
// kernel: tpu_custom_call.1
$region0: #{tpu_custom_call.1}
  #allocation0 [shape = 'u32[]', space=smem, size = 0x4, offset = 0x4, fixed_abs, tag = 'smem constant byte address 0x4 - core index']
  #allocation1 [shape = 'u32[144,128]{1,0:T(1,128)}', space=vmem, size = 0x12000, scoped, tag = 'internal scratch']
  %s0 = inlined_call_operand.vmem [shape: f32[2,32], index: 0, kind: input, shape index: {}]
  %s1 = inlined_call_operand.vmem [shape: f32[2,32], index: 1, kind: input, shape index: {}]
  %s2 = inlined_call_operand.vmem [shape: f32[2,32], index: 2, kind: input, shape index: {}]
  %s3 = inlined_call_operand.vmem [shape: f32[2,32], index: 3, kind: input, shape index: {}]
  %s4 = inlined_call_operand.vmem [shape: f32[2,32], index: 4, kind: input, shape index: {}]
  %s5 = inlined_call_operand.vmem [shape: f32[2,32], index: 5, kind: input, shape index: {}]
  %s6 = inlined_call_operand.vmem [shape: f32[2,32], index: 6, kind: input, shape index: {}]
  %s7 = inlined_call_operand.vmem [shape: f32[2,32], index: 7, kind: input, shape index: {}]
  %s8 = inlined_call_operand.vmem [shape: f32[32,8], index: 8, kind: input, shape index: {}]
  %s9 = inlined_call_operand.vmem [shape: f32[1,8], index: 9, kind: input, shape index: {}]
  %s10 = inlined_call_operand.hbm [shape: f32[2,18], index: 10, kind: output, shape index: {}]
  %s11 = sld [smem:[#allocation0]]
  $region50: #{tpu_custom_call.1} parent=0
    _
  %s13 = ssub.s32 1, %s11
  %s14 = scalar_select 0, %s13, %s11
  $region1: #{tpu_custom_call.1} parent=0
    #allocation2 [shape = 'u8[1024]{0}', space=vmem, size = 0x400, scoped, tag = 'output window, operand 0, single buffered']
    #allocation3 [shape = 's32[1]{0}', space=sflag, size = 0x4, scoped, tag = 'scoped memory for tpu_custom_call.1']
    %15 = vsyncpa [#allocation3], 0
    // Predicated region
    $region2: #{tpu_custom_call.1} parent=1 // pred_check
      _
    $region3: #{tpu_custom_call.1} parent=1 // pred_check_branch
      %17 = sbr.rel (0) target = $region5
    $region4: #{tpu_custom_call.1} parent=1 // pred_region
      _
    $region5: #{tpu_custom_call.1} parent=1 // pred_fallthru
      _
    // Predicated region
    $region6: #{tpu_custom_call.1} parent=1 // pred_check
      _
    $region7: #{tpu_custom_call.1} parent=1 // pred_check_branch
      %19 = sbr.rel (0) target = $region9
    $region8: #{tpu_custom_call.1} parent=1 // pred_region
      _
    $region9: #{tpu_custom_call.1} parent=1 // pred_fallthru
      _
    // Predicated region
    $region10: #{tpu_custom_call.1} parent=1 // pred_check
      _
    $region11: #{tpu_custom_call.1} parent=1 // pred_check_branch
      %21 = sbr.rel (0) target = $region13
    $region12: #{tpu_custom_call.1} parent=1 // pred_region
      _
    $region13: #{tpu_custom_call.1} parent=1 // pred_fallthru
      _
    // Predicated region
    $region14: #{tpu_custom_call.1} parent=1 // pred_check
      _
    $region15: #{tpu_custom_call.1} parent=1 // pred_check_branch
      %23 = sbr.rel (0) target = $region17
    $region16: #{tpu_custom_call.1} parent=1 // pred_region
      _
    $region17: #{tpu_custom_call.1} parent=1 // pred_fallthru
      _
    // Predicated region
    $region18: #{tpu_custom_call.1} parent=1 // pred_check
      _
    $region19: #{tpu_custom_call.1} parent=1 // pred_check_branch
      %25 = sbr.rel (0) target = $region21
    $region20: #{tpu_custom_call.1} parent=1 // pred_region
      _
    $region21: #{tpu_custom_call.1} parent=1 // pred_fallthru
      _
    // Predicated region
    $region22: #{tpu_custom_call.1} parent=1 // pred_check
      _
    $region23: #{tpu_custom_call.1} parent=1 // pred_check_branch
      %27 = sbr.rel (0) target = $region25
    $region24: #{tpu_custom_call.1} parent=1 // pred_region
      _
    $region25: #{tpu_custom_call.1} parent=1 // pred_fallthru
      _
    // Predicated region
    $region26: #{tpu_custom_call.1} parent=1 // pred_check
      _
    $region27: #{tpu_custom_call.1} parent=1 // pred_check_branch
      %29 = sbr.rel (0) target = $region29
    $region28: #{tpu_custom_call.1} parent=1 // pred_region
      _
    $region29: #{tpu_custom_call.1} parent=1 // pred_fallthru
      _
    // Predicated region
    $region30: #{tpu_custom_call.1} parent=1 // pred_check
      _
    $region31: #{tpu_custom_call.1} parent=1 // pred_check_branch
      %31 = sbr.rel (0) target = $region33
    $region32: #{tpu_custom_call.1} parent=1 // pred_region
      _
    $region33: #{tpu_custom_call.1} parent=1 // pred_fallthru
      _
    // Predicated region
    $region34: #{tpu_custom_call.1} parent=1 // pred_check
      _
    $region35: #{tpu_custom_call.1} parent=1 // pred_check_branch
      %33 = sbr.rel (0) target = $region37
    $region36: #{tpu_custom_call.1} parent=1 // pred_region
      _
    $region37: #{tpu_custom_call.1} parent=1 // pred_fallthru
      _
    // Predicated region
    $region38: #{tpu_custom_call.1} parent=1 // pred_check
      _
    $region39: #{tpu_custom_call.1} parent=1 // pred_check_branch
      %35 = sbr.rel (0) target = $region41
    $region40: #{tpu_custom_call.1} parent=1 // pred_region
      _
    $region41: #{tpu_custom_call.1} parent=1 // pred_fallthru
      _
    %v36 = vld [vmem:[%s0] sm:$0x3]
    %v37 = vld [vmem:[%s1] sm:$0x3]
    %v38 = vadd.f32 %v36, %v37
    %v39 = vld [vmem:[%s2] sm:$0x3]
    %v40 = vadd.f32 %v38, %v39
    %v41 = vld [vmem:[%s3] sm:$0x3]
    %v42 = vadd.f32 %v40, %v41
    %v43 = vld [vmem:[%s4] sm:$0x3]
    %v44 = vadd.f32 %v42, %v43
    %v45 = vld [vmem:[%s5] sm:$0x3]
    %v46 = vadd.f32 %v44, %v45
    %v47 = vld [vmem:[%s6] sm:$0x3]
    %v48 = vadd.f32 %v46, %v47
    %v49 = vld [vmem:[%s7] sm:$0x3]
    %v50 = vadd.f32 %v48, %v49
    %v51 = vmul.f32 %v50, 0.125
    %v52 = vld [vmem:[%s8] sm:$0xff]
    %v53 = vld [vmem:[%s8 + $0x8] sm:$0xff]
    %v54 = vld [vmem:[%s8 + $0x10] sm:$0xff]
    %v55 = vld [vmem:[%s8 + $0x18] sm:$0xff]
    %v56 = vld [vmem:[%s9] sm:$0x1]
    %v58 = vlaneseq
    %v59 = vshrl.u32 %v58, 7
    %v60 = vsub.s32 0, %v59
    %v61 = vrot.slane %v56, %v60
    %vm63 = vcmask 261120
    %v65 = vsel %vm63, %v51, 0
    %67 = vmatprep.subr.mxu0 0.0
    %68 = vmatpush1.msra.mxu0 0.0
    %69 = vmatprep.subr.mxu0 0.0
    %70 = vmatpush1.msra.mxu0 0.0
    %71 = vmatprep.subr.mxu0 0.0
    %72 = vmatpush1.msra.mxu0 0.0
    %73 = vmatprep.subr.mxu0 0.0
    %74 = vmatpush1.msra.mxu0 0.0
    %75 = vmatprep.subr.mxu0 0.0
    %76 = vmatpush1.msra.mxu0 0.0
    %77 = vmatprep.subr.mxu0 0.0
    %78 = vmatpush1.msra.mxu0 0.0
    %79 = vmatprep.subr.mxu0 0.0
    %80 = vmatpush1.msra.mxu0 0.0
    %81 = vmatprep.subr.mxu0 0.0
    %82 = vmatpush1.msra.mxu0 0.0
    %83 = vmatprep.subr.mxu0 0.0
    %84 = vmatpush1.msra.mxu0 0.0
    %85 = vmatprep.subr.mxu0 0.0
    %86 = vmatpush1.msra.mxu0 0.0
    %87 = vmatprep.subr.mxu0 0.0
    %88 = vmatpush1.msra.mxu0 0.0
    %89 = vmatprep.subr.mxu0 0.0
    %90 = vmatpush1.msra.mxu0 0.0
    %91 = vmatprep.subr.mxu0 0.0
    %92 = vmatpush1.msra.mxu0 %v55
    %93 = vmatprep.subr.mxu0 0.0
    %94 = vmatpush1.msra.mxu0 %v54
    %95 = vmatprep.subr.mxu0 0.0
    %96 = vmatpush1.msra.mxu0 %v53
    %97 = vmatprep.subr.mxu0 0.0
    %98 = vmatpush1.msra.mxu0 %v52
    %99 = vmatprep.subr.mxu0 0.0
    %100 = vmatpush2.msra.mxu0 0.0
    %101 = vmatprep.subr.mxu0 0.0
    %102 = vmatpush2.msra.mxu0 0.0
    %103 = vmatprep.subr.mxu0 0.0
    %104 = vmatpush2.msra.mxu0 0.0
    %105 = vmatprep.subr.mxu0 0.0
    %106 = vmatpush2.msra.mxu0 0.0
    %107 = vmatprep.subr.mxu0 0.0
    %108 = vmatpush2.msra.mxu0 0.0
    %109 = vmatprep.subr.mxu0 0.0
    %110 = vmatpush2.msra.mxu0 0.0
    %111 = vmatprep.subr.mxu0 0.0
    %112 = vmatpush2.msra.mxu0 0.0
    %113 = vmatprep.subr.mxu0 0.0
    %114 = vmatpush2.msra.mxu0 0.0
    %115 = vmatprep.subr.mxu0 0.0
    %116 = vmatpush2.msra.mxu0 0.0
    %117 = vmatprep.subr.mxu0 0.0
    %118 = vmatpush2.msra.mxu0 0.0
    %119 = vmatprep.subr.mxu0 0.0
    %120 = vmatpush2.msra.mxu0 0.0
    %121 = vmatprep.subr.mxu0 0.0
    %122 = vmatpush2.msra.mxu0 0.0
    %123 = vmatprep.subr.mxu0 0.0
    %124 = vmatpush2.msra.mxu0 0.0
    %125 = vmatprep.subr.mxu0 0.0
    %126 = vmatpush2.msra.mxu0 0.0
    %127 = vmatprep.subr.mxu0 0.0
    %128 = vmatpush2.msra.mxu0 0.0
    %129 = vmatprep.subr.mxu0 0.0
    %130 = vmatpush2.msra.mxu0 0.0
    %131 = vmatprep.mubr.f32.mxu0 0.0
    %132 = vmatmul.mubr.f32.gmra.mxu0 %v65
    %v133 = vpop.f32.mrf.mxu0
    %v134 = vadd.f32 %v61, %v133
    %v135 = vpop.f32.mrf.mxu0
    %136 = vdwg.mxu0
    %vm137 = vcmask 58368
    %v138 = vsel %vm137, %v134, -inf
    %139 = vmax.xlane.f32.xlu0 %v138
    %v140 = vpop.xlane.xlu0 %139
    %v141 = vsub.f32 %v134, %v140
    %v142 = vmul.f32 %v141, 1.442695
    %v143 = vpow.pop %v142
    %v144 = vsel %vm137, %v143, 0.0
    %145 = vadd.xlane.f32.xlu0 %v144
    %v146 = vpop.xlane.xlu0 %145
    %v147 = vrcp.pop %v146
    %v148 = vmul.f32 %v146, %v147
    %v149 = vsub.f32 2.0, %v148
    %v150 = vmul.f32 %v147, %v149
    %v151 = vmul.f32 %v143, %v150
    %v152 = vlaneseq
    %v153 = vshrl.u32 %v152, 7
    %v154 = vlaneseq
    %v155 = vand.u32 %v154, 127
    %v156 = vsub.s32 %v155, 9
    %vm157 = vcmp.lt.s32.totalorder %v153, %v155
    %v158 = vsel %vm157, 1, 0
    %v159 = vcvt.s32.f32 %v158
    %vm160 = vcmp.lt.s32.totalorder %v153, %v156
    %vm161 = vcmp.eq.s32.totalorder %v153, %v156
    %v162 = vsel %vm161, 0.5, 0.0
    %v163 = vsel %vm160, 1.0, %v162
    %vm164 = vcmp.le.s32.totalorder %v155, 8
    %v165 = vsel %vm164, %v159, %v163
    %vm166 = vcmask 64512
    %v168 = vsel %vm166, %v151, 0
    %170 = vmatprep.subr.mxu0 0.0
    %171 = vmatpush1.msra.mxu0 0.0
    %172 = vmatprep.subr.mxu0 0.0
    %173 = vmatpush1.msra.mxu0 0.0
    %174 = vmatprep.subr.mxu0 0.0
    %175 = vmatpush1.msra.mxu0 0.0
    %176 = vmatprep.subr.mxu0 0.0
    %177 = vmatpush1.msra.mxu0 0.0
    %178 = vmatprep.subr.mxu0 0.0
    %179 = vmatpush1.msra.mxu0 0.0
    %180 = vmatprep.subr.mxu0 0.0
    %181 = vmatpush1.msra.mxu0 0.0
    %182 = vmatprep.subr.mxu0 0.0
    %183 = vmatpush1.msra.mxu0 0.0
    %184 = vmatprep.subr.mxu0 0.0
    %185 = vmatpush1.msra.mxu0 0.0
    %186 = vmatprep.subr.mxu0 0.0
    %187 = vmatpush1.msra.mxu0 0.0
    %188 = vmatprep.subr.mxu0 0.0
    %189 = vmatpush1.msra.mxu0 0.0
    %190 = vmatprep.subr.mxu0 0.0
    %191 = vmatpush1.msra.mxu0 0.0
    %192 = vmatprep.subr.mxu0 0.0
    %193 = vmatpush1.msra.mxu0 0.0
    %194 = vmatprep.subr.mxu0 0.0
    %195 = vmatpush1.msra.mxu0 0.0
    %196 = vmatprep.subr.mxu0 0.0
    %197 = vmatpush1.msra.mxu0 0.0
    %198 = vmatprep.subr.mxu0 0.0
    %199 = vmatpush1.msra.mxu0 0.0
    %200 = vmatprep.subr.mxu0 0.0
    %201 = vmatpush1.msra.mxu0 %v165
    %202 = vmatprep.subr.mxu0 0.0
    %203 = vmatpush2.msra.mxu0 0.0
    %204 = vmatprep.subr.mxu0 0.0
    %205 = vmatpush2.msra.mxu0 0.0
    %206 = vmatprep.subr.mxu0 0.0
    %207 = vmatpush2.msra.mxu0 0.0
    %208 = vmatprep.subr.mxu0 0.0
    %209 = vmatpush2.msra.mxu0 0.0
    %210 = vmatprep.subr.mxu0 0.0
    %211 = vmatpush2.msra.mxu0 0.0
    %212 = vmatprep.subr.mxu0 0.0
    %213 = vmatpush2.msra.mxu0 0.0
    %214 = vmatprep.subr.mxu0 0.0
    %215 = vmatpush2.msra.mxu0 0.0
    %216 = vmatprep.subr.mxu0 0.0
    %217 = vmatpush2.msra.mxu0 0.0
    %218 = vmatprep.subr.mxu0 0.0
    %219 = vmatpush2.msra.mxu0 0.0
    %220 = vmatprep.subr.mxu0 0.0
    %221 = vmatpush2.msra.mxu0 0.0
    %222 = vmatprep.subr.mxu0 0.0
    %223 = vmatpush2.msra.mxu0 0.0
    %224 = vmatprep.subr.mxu0 0.0
    %225 = vmatpush2.msra.mxu0 0.0
    %226 = vmatprep.subr.mxu0 0.0
    %227 = vmatpush2.msra.mxu0 0.0
    %228 = vmatprep.subr.mxu0 0.0
    %229 = vmatpush2.msra.mxu0 0.0
    %230 = vmatprep.subr.mxu0 0.0
    %231 = vmatpush2.msra.mxu0 0.0
    %232 = vmatprep.subr.mxu0 0.0
    %233 = vmatpush2.msra.mxu0 0.0
    %234 = vmatprep.mubr.f32.mxu0 0.0
    %235 = vmatmul.mubr.f32.gmra.mxu0 %v168
    %v236 = vpop.f32.mrf.mxu0
    %v237 = vadd.f32 0.0, %v236
    %v238 = vpop.f32.mrf.mxu0
    %239 = vdwg.mxu0
    %v240 = vlog2.pop %v146
    %v241 = vmul.f32 %v240, 0.6931472
    %v242 = vmul.f32 %v151, %v141
    %v243 = vsel %vm137, %v242, 0.0
    %244 = vadd.xlane.f32.xlu0 %v243
    %v245 = vpop.xlane.xlu0 %244
    %v246 = vsub.f32 %v241, %v245
    %vm247 = vcmask 132096
    %248 = vst.msk [vmem:[#allocation2] sm:$0x3] %vm247, %v237
    %vm249 = vcmask 140424
    %250 = vst.msk [vmem:[#allocation2] sm:$0x3] %vm249, %v246
    // Predicated region
    $region42: #{tpu_custom_call.1} parent=1 // pred_check
      _
    $region43: #{tpu_custom_call.1} parent=1 // pred_check_branch
      %252 = sbr.rel (0) target = $region45
    $region44: #{tpu_custom_call.1} parent=1 // pred_region
      %s254 = ssub.s32 32, 32
      %255 = vsyncadd [#allocation3], %s254
      %s257 = sshll.u32 [#allocation2], 4
      %s258 = int_to_ptr.vmem [resolvable:$true] %s257
      %260 = dma.vmem_to_hbm [thread:$0]  %s258, 32, %s10, [#allocation3]
    $region45: #{tpu_custom_call.1} parent=1 // pred_fallthru
      _
    // Predicated region
    $region46: #{tpu_custom_call.1} parent=1 // pred_check
      _
    $region47: #{tpu_custom_call.1} parent=1 // pred_check_branch
      %262 = sbr.rel (0) target = $region49
    $region48: #{tpu_custom_call.1} parent=1 // pred_region
      %263 = dma.done [#allocation3], 32
    $region49: #{tpu_custom_call.1} parent=1 // pred_fallthru
      _
    %264 = vsyncpa [#allocation3], 1

</llo_original>
